<compile_context>
chip_gen: v6e
topology: v6e:2x2x1
jax: 0.10.0
libtpu: 0.0.40
codegen_flags: <defaults>
</compile_context>

<pallas_src>
import functools
import math

import jax
import jax.numpy as jnp
from jax.experimental import pallas as pl
from jax.experimental.pallas import tpu as pltpu

LN_EPS = 1e-5


def _merge_ln_reduce_kernel(x_ref, w_ref, bias_ref, o_ref, *, inv_k, eps):
    """Fused 2x2 merge + LayerNorm(4C) + Linear(4C->2C, no bias), one row tile.

    x_ref:    (tr, 2, W2, 2C)  tr h2-rows; axes = (row, dh, w2, (dw, c))
    w_ref:    (4C, N) bf16     LN-scale-folded reduction weight, rows in the
                               kernel's (dh, dw, c) channel order
    bias_ref: (1, N)  f32      beta @ W  (LN shift folded through the linear)
    o_ref:    (tr*W2, N)
    """
    tr, _, w2, c2 = x_ref.shape
    rows = tr * w2

    xf = x_ref[...].astype(jnp.float32)

    # Two-pass (centered) LayerNorm stats over the merged 4C channels
    # (axes dh and (dw,c)).  More accurate than E[x^2]-E[x]^2 and the centered
    # tensor is reused for normalization, so no extra f32 temps.
    mean = jnp.sum(xf, axis=(1, 3), keepdims=True) * inv_k        # (tr,1,W2,1)
    d = xf - mean
    var = jnp.sum(d * d, axis=(1, 3), keepdims=True) * inv_k
    rstd = jax.lax.rsqrt(var + eps)
    xn = (d * rstd).astype(w_ref.dtype)                           # bf16

    # Lane-concat the dh=0 / dh=1 halves -> (rows, 4C) in (dh, dw, c) channel
    # order, then a single K=4C MXU matmul.
    x4 = jnp.concatenate(
        [xn[:, 0].reshape(rows, c2), xn[:, 1].reshape(rows, c2)], axis=-1)
    acc = jnp.dot(x4, w_ref[...], preferred_element_type=jnp.float32)
    o_ref[...] = (acc + bias_ref[...]).astype(o_ref.dtype)


def _tpu_vmem_capacity_bytes():
    """Per-core VMEM capacity; conservative (v7x per-TC) fallback on failure."""
    try:
        return int(pltpu.get_tpu_info().vmem_capacity_bytes)
    except Exception:
        return 64 * 1024 * 1024


def _resident_spec(block_shape):
    """BlockSpec for a grid-invariant operand (weights / bias): constant index
    map, single-buffered when the installed Pallas supports pipeline_mode."""
    index_map = lambda i: (0,) * len(block_shape)
    try:
        return pl.BlockSpec(block_shape, index_map, pipeline_mode=pl.Buffered(1))
    except (TypeError, AttributeError):
        return pl.BlockSpec(block_shape, index_map)


def _choose_row_tile(bh2, w2, c2, itemsize, target_block_bytes, min_steps=8):
    """Pick the per-step tile size in h2-rows.

    Sized by bytes (the kernel is HBM-bound for realistic Swin C) while
    keeping (a) at least `min_steps` grid steps so the DMA pipeline stays
    busy and v7x's two TensorCores both get work, (b) the output tile
    sublane-aligned (tr*W2 % 8 == 0), and (c) an even step count when cheap.
    """
    step = 8 // math.gcd(w2, 8)                 # tr multiple of this => tr*W2 % 8 == 0
    row_bytes = 2 * w2 * c2 * itemsize          # bytes per h2-row of the input view
    tr = max(1, target_block_bytes // row_bytes)
    tr = min(tr, max(1, bh2 // min_steps))      # never collapse the pipeline
    tr = max(step, (tr // step) * step)
    if tr >= bh2:
        # Tiny problem: a single full block is the only aligned option left.
        return bh2
    nsteps = -(-bh2 // tr)
    guard = 0
    while nsteps > 1 and nsteps % 2 == 1 and tr > step and guard < 64:
        tr -= step                              # nudge to an even step count (v7x 2 TCs)
        nsteps = -(-bh2 // tr)
        guard += 1
    return tr


def patch_merging_forward(x, params, input_resolution, *,
                          out_dtype=None, target_block_bytes=None):
    """Equivalent of PatchMerging.forward: (B, H*W, C) -> (B, H*W/4, 2C)."""
    H, W = input_resolution
    B, L, C = x.shape
    assert L == H * W, "input feature has wrong size"
    assert H % 2 == 0 and W % 2 == 0, f"x size ({H}*{W}) are not even."
    H2, W2 = H // 2, W // 2
    K, N = 4 * C, 2 * C
    BH2 = B * H2
    M = BH2 * W2
    out_dtype = x.dtype if out_dtype is None else out_dtype

    # Generation-gated VMEM budget: ~75% of this core's VMEM (=> ~96 MiB on
    # 128-MiB v5e/v6e, ~48 MiB on 64-MiB/TC v7x) and a matching block target.
    vmem_cap = _tpu_vmem_capacity_bytes()
    vmem_limit = max(32 * 1024 * 1024,
                     min(vmem_cap * 3 // 4, 100 * 1024 * 1024))
    if target_block_bytes is None:
        target_block_bytes = (6 if vmem_cap >= (96 << 20) else 4) * 1024 * 1024

    # Fold the LayerNorm affine into the reduction weight (exact algebra) and
    # permute its rows into the kernel's (dh, dw, c) channel order.  Torch's
    # merged-4C channel order is [(dh0,dw0),(dh1,dw0),(dh0,dw1),(dh1,dw1)].
    w_t = params["reduction_w_t"].astype(jnp.float32)      # (4C, 2C)
    gamma = params["norm_gamma"].astype(jnp.float32)       # (4C,)
    beta = params["norm_beta"].astype(jnp.float32)         # (4C,)
    wg = w_t * gamma[:, None]
    w_fused = jnp.concatenate(
        [wg[0:C], wg[2 * C:3 * C], wg[C:2 * C], wg[3 * C:4 * C]], axis=0
    ).astype(jnp.bfloat16)                                 # (4C, N)
    bias = (beta @ w_t).reshape(1, N).astype(jnp.float32)

    # Free reshape: (B, H*W, C) -> (B*H2, 2, W2, 2C); no HBM data movement.
    xr = x.reshape(BH2, 2, W2, N)

    tr = _choose_row_tile(BH2, W2, N, x.dtype.itemsize, target_block_bytes)
    grid = (pl.cdiv(BH2, tr),)

    out = pl.pallas_call(
        functools.partial(_merge_ln_reduce_kernel, inv_k=1.0 / K, eps=LN_EPS),
        out_shape=jax.ShapeDtypeStruct((M, N), out_dtype),
        grid_spec=pltpu.PrefetchScalarGridSpec(
            num_scalar_prefetch=0,
            grid=grid,
            in_specs=[
                # Contiguous HBM window: both dh rows of tr h2-rows.
                pl.BlockSpec((tr, 2, W2, N), lambda i: (i, 0, 0, 0)),
                # Grid-invariant operands: resident, single-buffered.
                _resident_spec((K, N)),
                _resident_spec((1, N)),
            ],
            out_specs=pl.BlockSpec((tr * W2, N), lambda i: (i, 0)),
        ),
        compiler_params=pltpu.CompilerParams(
            # "parallel" lets megacore (v7x) split the grid; grid length is
            # kept >= ~8 and even so both TensorCores stay loaded.
            dimension_semantics=("parallel",),
            vmem_limit_bytes=vmem_limit,
        ),
    )(xr, w_fused, bias)

    return out.reshape(B, H2 * W2, N)


def init_params(key, dim, dtype=jnp.float32):
    """Deterministic synthetic parameters matching the module's __init__."""
    k_w, k_g, k_b = jax.random.split(key, 3)
    # torch nn.Linear weight is (out=2*dim, in=4*dim); we store its transpose.
    w = jax.random.normal(k_w, (2 * dim, 4 * dim), dtype) * 0.02
    gamma = 1.0 + 0.01 * jax.random.normal(k_g, (4 * dim,), dtype)
    beta = 0.01 * jax.random.normal(k_b, (4 * dim,), dtype)
    return {
        "reduction_w_t": jnp.transpose(w),   # (4*dim, 2*dim)
        "norm_gamma": gamma,
        "norm_beta": beta,
    }


def _reference_forward(x, params, input_resolution):
    """Pure-JAX f32 reference for correctness checking."""
    H, W = input_resolution
    B, L, C = x.shape
    xv = x.reshape(B, H, W, C)
    merged = jnp.concatenate(
        [xv[:, 0::2, 0::2, :], xv[:, 1::2, 0::2, :],
         xv[:, 0::2, 1::2, :], xv[:, 1::2, 1::2, :]], axis=-1
    ).reshape(B, -1, 4 * C)
    mean = jnp.mean(merged, axis=-1, keepdims=True)
    var = jnp.mean((merged - mean) ** 2, axis=-1, keepdims=True)
    xn = (merged - mean) / jnp.sqrt(var + LN_EPS)
    y = xn * params["norm_gamma"] + params["norm_beta"]
    return y @ params["reduction_w_t"]


if __name__ == "__main__":
    B, C = 2, 32
    H, W = 16, 16
    input_resolution = (H, W)

    key = jax.random.PRNGKey(0)
    k_x, k_p = jax.random.split(key)
    x = jax.random.normal(k_x, (B, H * W, C), jnp.float32)
    params = init_params(k_p, C)

    fwd = jax.jit(functools.partial(patch_merging_forward,
                                    input_resolution=input_resolution))
    out = fwd(x, params)
    jax.block_until_ready(out)

    ref = _reference_forward(x, params, input_resolution)
    assert out.shape == (B, (H // 2) * (W // 2), 2 * C), out.shape
    # bf16 MXU inputs -> slightly looser tolerance than a pure-f32 pipeline.
    max_err = float(jnp.max(jnp.abs(out - ref)))
    assert jnp.allclose(out, ref, atol=2e-2, rtol=2e-2), f"mismatch, max_err={max_err}"

    print("KERNEL_OK")
</pallas_src>

<mosaic_0001>
module attributes {stable_mosaic.version = 11 : i64} {
  func.func @_merge_ln_reduce_kernel(%arg0: i32, %arg1: memref<2x2x8x64xf32, #tpu.memory_space<vmem>>, %arg2: memref<128x64xbf16, #tpu.memory_space<vmem>>, %arg3: memref<1x64xf32, #tpu.memory_space<vmem>>, %arg4: memref<16x64xf32, #tpu.memory_space<vmem>>) attributes {dimension_semantics = [#tpu.dimension_semantics<parallel>], iteration_bounds = array<i64: 8>, scalar_prefetch = 0 : i64, scratch_operands = 0 : i64, tpu.core_type = #tpu.core_type<tc>, window_params = [{transform_indices = @transform_0, window_bounds = array<i64: 2, 2, 8, 64>}, {pipeline_mode = #tpu.pipeline_mode<synchronous>, transform_indices = @transform_1, window_bounds = array<i64: 128, 64>}, {pipeline_mode = #tpu.pipeline_mode<synchronous>, transform_indices = @transform_2, window_bounds = array<i64: 1, 64>}, {transform_indices = @transform_3, window_bounds = array<i64: 16, 64>}]} {
    %c0 = arith.constant 0 : index
    %c0_0 = arith.constant 0 : index
    %c0_1 = arith.constant 0 : index
    %c0_2 = arith.constant 0 : index
    %0 = vector.load %arg1[%c0, %c0_0, %c0_1, %c0_2] : memref<2x2x8x64xf32, #tpu.memory_space<vmem>>, vector<2x2x8x64xf32>
    %cst = arith.constant dense<0.000000e+00> : vector<2x8xf32>
    %1 = vector.multi_reduction <add>, %0, %cst [1, 3] : vector<2x2x8x64xf32> to vector<2x8xf32>
    %2 = vector.shape_cast %1 : vector<2x8xf32> to vector<2x1x8x1xf32>
    %cst_3 = arith.constant 7.812500e-03 : f32
    %3 = vector.broadcast %cst_3 : f32 to vector<2x1x8x1xf32>
    %4 = arith.mulf %2, %3 : vector<2x1x8x1xf32>
    %5 = vector.broadcast %4 : vector<2x1x8x1xf32> to vector<2x2x8x64xf32>
    %6 = arith.subf %0, %5 : vector<2x2x8x64xf32>
    %7 = arith.mulf %6, %6 : vector<2x2x8x64xf32>
    %cst_4 = arith.constant dense<0.000000e+00> : vector<2x8xf32>
    %8 = vector.multi_reduction <add>, %7, %cst_4 [1, 3] : vector<2x2x8x64xf32> to vector<2x8xf32>
    %9 = vector.shape_cast %8 : vector<2x8xf32> to vector<2x1x8x1xf32>
    %cst_5 = arith.constant 7.812500e-03 : f32
    %10 = vector.broadcast %cst_5 : f32 to vector<2x1x8x1xf32>
    %11 = arith.mulf %9, %10 : vector<2x1x8x1xf32>
    %cst_6 = arith.constant 9.99999974E-6 : f32
    %12 = vector.broadcast %cst_6 : f32 to vector<2x1x8x1xf32>
    %13 = arith.addf %11, %12 : vector<2x1x8x1xf32>
    %14 = math.rsqrt %13 : vector<2x1x8x1xf32>
    %15 = vector.broadcast %14 : vector<2x1x8x1xf32> to vector<2x2x8x64xf32>
    %16 = arith.mulf %6, %15 : vector<2x2x8x64xf32>
    %17 = arith.truncf %16 : vector<2x2x8x64xf32> to vector<2x2x8x64xbf16>
    %18 = vector.extract_strided_slice %17 {offsets = [0, 0, 0, 0], sizes = [2, 1, 8, 64], strides = [1, 1, 1, 1]} : vector<2x2x8x64xbf16> to vector<2x1x8x64xbf16>
    %19 = vector.shape_cast %18 : vector<2x1x8x64xbf16> to vector<2x8x64xbf16>
    %20 = vector.shape_cast %19 : vector<2x8x64xbf16> to vector<16x64xbf16>
    %21 = vector.extract_strided_slice %17 {offsets = [0, 1, 0, 0], sizes = [2, 1, 8, 64], strides = [1, 1, 1, 1]} : vector<2x2x8x64xbf16> to vector<2x1x8x64xbf16>
    %22 = vector.shape_cast %21 : vector<2x1x8x64xbf16> to vector<2x8x64xbf16>
    %23 = vector.shape_cast %22 : vector<2x8x64xbf16> to vector<16x64xbf16>
    %24 = tpu.concatenate %20, %23 in 1 : vector<16x64xbf16>, vector<16x64xbf16> -> vector<16x128xbf16>
    %c0_7 = arith.constant 0 : index
    %c0_8 = arith.constant 0 : index
    %25 = vector.load %arg2[%c0_7, %c0_8] : memref<128x64xbf16, #tpu.memory_space<vmem>>, vector<128x64xbf16>
    %cst_9 = arith.constant dense<0.000000e+00> : vector<16x64xf32>
    %26 = tpu.matmul %24, %25, %cst_9 {dimension_numbers = #tpu.dot_dimension_numbers<[1], [0], [0], [1], [0, 0, 1, 1], [], []>} : vector<16x128xbf16>, vector<128x64xbf16>, vector<16x64xf32> -> vector<16x64xf32>
    %c0_10 = arith.constant 0 : index
    %c0_11 = arith.constant 0 : index
    %27 = vector.load %arg3[%c0_10, %c0_11] : memref<1x64xf32, #tpu.memory_space<vmem>>, vector<1x64xf32>
    %28 = vector.broadcast %27 : vector<1x64xf32> to vector<16x64xf32>
    %29 = arith.addf %26, %28 : vector<16x64xf32>
    %c0_12 = arith.constant 0 : index
    %c0_13 = arith.constant 0 : index
    %30 = vector.load %arg4[%c0_12, %c0_13] : memref<16x64xf32, #tpu.memory_space<vmem>>, vector<16x64xf32>
    tpu.vector_store %arg4[%c0_12, %c0_13], %29 {strides = array<i32>} : memref<16x64xf32, #tpu.memory_space<vmem>>, vector<16x64xf32>,
    return
  }
  func.func @transform_0(%arg0: i32) -> (i32, i32, i32, i32) {
    %c0_i32 = arith.constant 0 : i32
    %c0_i32_0 = arith.constant 0 : i32
    %c0_i32_1 = arith.constant 0 : i32
    %c0_i32_2 = arith.constant 0 : i32
    return %arg0, %c0_i32, %c0_i32_0, %c0_i32_1 : i32, i32, i32, i32
  }
  func.func @transform_1(%arg0: i32) -> (i32, i32) {
    %c0_i32 = arith.constant 0 : i32
    %c0_i32_0 = arith.constant 0 : i32
    %c0_i32_1 = arith.constant 0 : i32
    return %c0_i32, %c0_i32_0 : i32, i32
  }
  func.func @transform_2(%arg0: i32) -> (i32, i32) {
    %c0_i32 = arith.constant 0 : i32
    %c0_i32_0 = arith.constant 0 : i32
    %c0_i32_1 = arith.constant 0 : i32
    return %c0_i32, %c0_i32_0 : i32, i32
  }
  func.func @transform_3(%arg0: i32) -> (i32, i32) {
    %c0_i32 = arith.constant 0 : i32
    %c0_i32_0 = arith.constant 0 : i32
    return %arg0, %c0_i32 : i32, i32
  }
}

</mosaic_0001>

<llo_original>
// kernel: patch_merging_forward.1
$region0: #{patch_merging_forward.1}
  #allocation0 [shape = 'u32[]', space=smem, size = 0x4, offset = 0x4, fixed_abs, tag = 'smem constant byte address 0x4 - core index']
  #allocation1 [shape = 'u32[144,128]{1,0:T(1,128)}', space=vmem, size = 0x12000, scoped, tag = 'internal scratch']
  %s0 = inlined_call_operand.vmem [shape: f32[16,2,8,64], index: 0, kind: input, shape index: {}]
  %s1 = inlined_call_operand.vmem [shape: bf16[128,64], index: 1, kind: input, shape index: {}]
  %s2 = inlined_call_operand.vmem [shape: f32[1,64], index: 2, kind: input, shape index: {}]
  %s3 = inlined_call_operand.hbm [shape: f32[128,64], index: 3, kind: output, shape index: {}]
  %s4 = sld [smem:[#allocation0]]
  $region45: #{patch_merging_forward.1} parent=0
    _
  %s6 = ssub.s32 1, %s4
  %s7 = scalar_select 0, %s6, %s4
  $region1: #{patch_merging_forward.1} parent=0
    #allocation2 [shape = 'u8[16384]{0}', space=vmem, size = 0x4000, scoped, tag = 'output window, operand 0']
    #allocation3 [shape = 's32[2]{0}', space=sflag, size = 0x8, scoped, tag = 'scoped memory for patch_merging_forward.1']
    %8 = vsyncpa [#allocation3], 0
    %s9 = scalar_lea.sflag [#allocation3], 1
    %10 = vsyncpa %s9, 0
    loop: start=0, step=1, limit=10
    $region2: #{patch_merging_forward.1} parent=1 // loop_pre_header
      _
    $region3: #{patch_merging_forward.1} parent=1 // loop_header
      %s12 = sphi 0, %s16
      %p13 = scmp.ge.s32.totalorder %s12, 10
      %s22 = sphi 0, %s24
      %s25 = sphi 0, %s22
      %s26 = sphi 0, %s25
      %s42 = sphi 0, %s26
      %s46 = sphi 0, %s46
      %s48 = sphi 0, %s46
      %s49 = sphi 0, %s48
      %s63 = sphi 0, %s49
      %s67 = sphi 0, %s67
      %s69 = sphi 0, %s67
      %s70 = sphi 0, %s69
      %s84 = sphi 0, %s70
      %s90 = sphi 0, %s92
      %s93 = sphi 0, %s90
      %s94 = sphi 0, %s93
      %s110 = sphi 0, %s94
    $region4: #{patch_merging_forward.1} parent=1 // loop_header_branch
      %15 = sbr.rel (%p13) target = $region8
    $region5: #{patch_merging_forward.1} parent=1 // loop_body
      %s17 = ssub.s32 %s12, 1
      %s18 = ssub.s32 %s12, 2
      %s19 = sadd.s32 %s12, 1
      %s20 = ssub.s32 %s12, %s19
      %p21 = scmp.eq.s32.totalorder %s20, 0
      %s23 = sadd.s32 %s22, 1
      %s24 = scalar_select %p21, %s22, %s23
      %p27 = pneg %p21
      %p28 = scmp.eq.s32.totalorder %s12, 7
      %p29 = por %p27, %p28
      %p30 = scmp.ne.s32.totalorder %s22, %s25
      %p31 = scmp.eq.s32.totalorder %s12, 0
      %p32 = por %p30, %p31
      %p33 = scmp.ne.s32.totalorder %s22, %s25
      %p34 = scmp.eq.s32.totalorder %s17, 7
      %p35 = por %p33, %p34
      %p36 = scmp.ne.s32.totalorder %s25, %s26
      %p37 = scmp.eq.s32.totalorder %s17, 0
      %p38 = por %p36, %p37
      %p39 = scmp.ne.s32.totalorder %s25, %s26
      %p40 = scmp.eq.s32.totalorder %s18, 7
      %p41 = por %p39, %p40
      %p43 = scmp.ne.s32.totalorder %s26, %s42
      %p44 = scmp.eq.s32.totalorder %s18, 0
      %p45 = por %p43, %p44
      %s47 = sadd.s32 %s46, 1
      %p50 = scmp.eq.s32.totalorder %s12, 7
      %p51 = scmp.ne.s32.totalorder %s46, %s48
      %p52 = scmp.eq.s32.totalorder %s12, 0
      %p53 = por %p51, %p52
      %p54 = scmp.ne.s32.totalorder %s46, %s48
      %p55 = scmp.eq.s32.totalorder %s17, 7
      %p56 = por %p54, %p55
      %p57 = scmp.ne.s32.totalorder %s48, %s49
      %p58 = scmp.eq.s32.totalorder %s17, 0
      %p59 = por %p57, %p58
      %p60 = scmp.ne.s32.totalorder %s48, %s49
      %p61 = scmp.eq.s32.totalorder %s18, 7
      %p62 = por %p60, %p61
      %p64 = scmp.ne.s32.totalorder %s49, %s63
      %p65 = scmp.eq.s32.totalorder %s18, 0
      %p66 = por %p64, %p65
      %s68 = sadd.s32 %s67, 1
      %p71 = scmp.eq.s32.totalorder %s12, 7
      %p72 = scmp.ne.s32.totalorder %s67, %s69
      %p73 = scmp.eq.s32.totalorder %s12, 0
      %p74 = por %p72, %p73
      %p75 = scmp.ne.s32.totalorder %s67, %s69
      %p76 = scmp.eq.s32.totalorder %s17, 7
      %p77 = por %p75, %p76
      %p78 = scmp.ne.s32.totalorder %s69, %s70
      %p79 = scmp.eq.s32.totalorder %s17, 0
      %p80 = por %p78, %p79
      %p81 = scmp.ne.s32.totalorder %s69, %s70
      %p82 = scmp.eq.s32.totalorder %s18, 7
      %p83 = por %p81, %p82
      %p85 = scmp.ne.s32.totalorder %s70, %s84
      %p86 = scmp.eq.s32.totalorder %s18, 0
      %p87 = por %p85, %p86
      %s88 = ssub.s32 %s12, %s19
      %p89 = scmp.eq.s32.totalorder %s88, 0
      %s91 = sadd.s32 %s90, 1
      %s92 = scalar_select %p89, %s90, %s91
      %p95 = pneg %p89
      %p96 = scmp.eq.s32.totalorder %s12, 7
      %p97 = por %p95, %p96
      %p98 = scmp.ne.s32.totalorder %s90, %s93
      %p99 = scmp.eq.s32.totalorder %s12, 0
      %p100 = por %p98, %p99
      %p101 = scmp.ne.s32.totalorder %s90, %s93
      %p102 = scmp.eq.s32.totalorder %s17, 7
      %p103 = por %p101, %p102
      %p104 = scmp.ne.s32.totalorder %s93, %s94
      %p105 = scmp.eq.s32.totalorder %s17, 0
      %p106 = por %p104, %p105
      %p107 = scmp.ne.s32.totalorder %s93, %s94
      %p108 = scmp.eq.s32.totalorder %s18, 7
      %p109 = por %p107, %p108
      %p111 = scmp.ne.s32.totalorder %s94, %s110
      %p112 = scmp.eq.s32.totalorder %s18, 0
      %p113 = por %p111, %p112
      %p114 = scmp.le.s32.totalorder 1, %s12
      %p115 = scmp.lt.s32.totalorder %s12, 9
      %p116 = pnand %p114, %p115
      %p117 = pneg %p116
      // Predicated region
      $region9: #{patch_merging_forward.1} parent=5 // pred_check
        _
      $region10: #{patch_merging_forward.1} parent=5 // pred_check_branch
        %119 = sbr.rel (%p116) target = $region12
      $region11: #{patch_merging_forward.1} parent=5 // pred_region
        %s120 = ssub.s32 %s12, 1
        // Predicated region
        $region13: #{patch_merging_forward.1} parent=11 // pred_check
          %p121 = pneg %p59
        $region14: #{patch_merging_forward.1} parent=11 // pred_check_branch
          %123 = sbr.rel (%p121) target = $region16
        $region15: #{patch_merging_forward.1} parent=11 // pred_region
          _
        $region16: #{patch_merging_forward.1} parent=11 // pred_fallthru
          _
        // Predicated region
        $region17: #{patch_merging_forward.1} parent=11 // pred_check
          %p124 = pneg %p80
        $region18: #{patch_merging_forward.1} parent=11 // pred_check_branch
          %126 = sbr.rel (%p124) target = $region20
        $region19: #{patch_merging_forward.1} parent=11 // pred_region
          _
        $region20: #{patch_merging_forward.1} parent=11 // pred_fallthru
          _
      $region12: #{patch_merging_forward.1} parent=5 // pred_fallthru
        _
      %p127 = scmp.lt.s32.totalorder %s12, 8
      // Predicated region
      $region21: #{patch_merging_forward.1} parent=5 // pred_check
        %p128 = pneg %p127
      $region22: #{patch_merging_forward.1} parent=5 // pred_check_branch
        %130 = sbr.rel (%p128) target = $region24
      $region23: #{patch_merging_forward.1} parent=5 // pred_region
        // Predicated region
        $region25: #{patch_merging_forward.1} parent=23 // pred_check
          %p131 = pneg %p32
        $region26: #{patch_merging_forward.1} parent=23 // pred_check_branch
          %133 = sbr.rel (%p131) target = $region28
        $region27: #{patch_merging_forward.1} parent=23 // pred_region
          %s134 = smul.u32 2, %s12
          %p135 = scmp.lt.s32.totalorder %s134, 15
          %s136 = scalar_select %p135, %s134, 15
          %s137 = smul.addr %s136, 2
          %s138 = smul.addr %s137, 8
          %s139 = scalar_lea.vmem %s0, %s138
          %s140 = smul.u32 2, %s12
        $region28: #{patch_merging_forward.1} parent=23 // pred_fallthru
          _
      $region24: #{patch_merging_forward.1} parent=5 // pred_fallthru
        _
      %p141 = scmp.le.s32.totalorder 1, %s12
      %p142 = scmp.lt.s32.totalorder %s12, 9
      %p143 = pnand %p141, %p142
      %p144 = pneg %p143
      // Predicated region
      $region29: #{patch_merging_forward.1} parent=5 // pred_check
        _
      $region30: #{patch_merging_forward.1} parent=5 // pred_check_branch
        %146 = sbr.rel (%p143) target = $region32
      $region31: #{patch_merging_forward.1} parent=5 // pred_region
        %s147 = ssub.s32 %s12, 1
        %s148 = smul.u32 2, %s17
        %p149 = scmp.lt.s32.totalorder %s148, 15
        %s150 = scalar_select %p149, %s148, 15
        %s151 = smul.addr %s150, 2
        %s152 = smul.addr %s151, 8
        %s153 = scalar_lea.vmem %s0, %s152
        %p154 = pneg %p38
        %p155 = pneg %p35
        %p156 = pneg %p59
        %p157 = pneg %p56
        %p158 = pneg %p80
        %p159 = pneg %p77
        %p160 = pneg %p106
        %p161 = pneg %p103
        %s162 = sand.u32 %s93, 1
        %s163 = scalar_lea.sflag [#allocation3], %s162
        %s164 = sand.u32 %s93, 1
        %s165 = smul.addr %s164, 16
        %s166 = scalar_lea.vmem [#allocation2], %s165
        %s167 = smul.u32 2, %s17
        %p168 = scmp.lt.s32.totalorder %s167, 15
        %s169 = scalar_select %p168, %s167, 15
        %s170 = smul.addr %s169, 2
        %s171 = smul.addr %s170, 8
        %s172 = scalar_lea.vmem %s0, %s171
        %s173 = smul.u32 2, %s17
        %s174 = smul.u32 2, %s17
        %v176 = vld [vmem:[%s172] sm:$0xff]
        %v177 = vld [vmem:[%s172 + $0x8] sm:$0xff]
        %v178 = vld [vmem:[%s172 + $0x10] sm:$0xff]
        %v179 = vld [vmem:[%s172 + $0x18] sm:$0xff]
        %vm180 = vcmask 523264
        %v181 = vsel %vm180, %v176, 0.0
        %v182 = vsel %vm180, %v177, 0.0
        %v183 = vadd.f32 %v181, %v182
        %184 = vadd.xlane.f32.xlu0 %v183
        %v185 = vpop.xlane.xlu0 %184
        %v186 = vsel %vm180, %v178, 0.0
        %v187 = vsel %vm180, %v179, 0.0
        %v188 = vadd.f32 %v186, %v187
        %189 = vadd.xlane.f32.xlu0 %v188
        %v190 = vpop.xlane.xlu0 %189
        %v191 = vmul.f32 %v185, 0.0078125
        %v192 = vmul.f32 %v190, 0.0078125
        %v193 = vsub.f32 %v176, %v191
        %v194 = vsub.f32 %v177, %v191
        %v195 = vsub.f32 %v178, %v192
        %v196 = vsub.f32 %v179, %v192
        %v197 = vmul.f32 %v193, %v193
        %v198 = vmul.f32 %v194, %v194
        %v199 = vmul.f32 %v195, %v195
        %v200 = vmul.f32 %v196, %v196
        %v201 = vsel %vm180, %v197, 0.0
        %v202 = vsel %vm180, %v198, 0.0
        %v203 = vadd.f32 %v201, %v202
        %204 = vadd.xlane.f32.xlu0 %v203
        %v205 = vpop.xlane.xlu0 %204
        %v206 = vsel %vm180, %v199, 0.0
        %v207 = vsel %vm180, %v200, 0.0
        %v208 = vadd.f32 %v206, %v207
        %209 = vadd.xlane.f32.xlu0 %v208
        %v210 = vpop.xlane.xlu0 %209
        %v211 = vmul.f32 %v205, 0.0078125
        %v212 = vmul.f32 %v210, 0.0078125
        %v213 = vadd.f32 %v211, 1e-05
        %v214 = vadd.f32 %v212, 1e-05
        %v215 = vrsqrt.pop %v213
        %v216 = vrsqrt.pop %v214
        %v217 = vmul.f32 %v193, %v215
        %v218 = vmul.f32 %v194, %v215
        %v219 = vmul.f32 %v195, %v216
        %v220 = vmul.f32 %v196, %v216
        %v221 = vpack.c.bf16 %v217, %v217
        %v222 = vpack.c.bf16 %v218, %v218
        %v223 = vpack.c.bf16 %v219, %v219
        %v224 = vpack.c.bf16 %v220, %v220
        %v227 = vunpack.c.l.b16 %v221
        %v228 = vunpack.c.l.b16 %v223
        %v229 = vpack.c.b16 %v228, %v227
        %v232 = vunpack.c.l.b16 %v222
        %v233 = vunpack.c.l.b16 %v224
        %v234 = vpack.c.b16 %v233, %v232
        %235 = vrot.lane.b32.xlu0 %v234, 64
        %v236 = vpop.permute.xlu0 %235
        %v239 = vsel %vm180, %v229, %v236
        %v241 = vld [vmem:[%s1] sm:$0xf]
        %v242 = vld [vmem:[%s1 + $0x4] sm:$0xf]
        %v243 = vld [vmem:[%s1 + $0x8] sm:$0xf]
        %v244 = vld [vmem:[%s1 + $0xc] sm:$0xf]
        %v245 = vld [vmem:[%s1 + $0x10] sm:$0xf]
        %v246 = vld [vmem:[%s1 + $0x14] sm:$0xf]
        %v247 = vld [vmem:[%s1 + $0x18] sm:$0xf]
        %v248 = vld [vmem:[%s1 + $0x1c] sm:$0xf]
        %v249 = vld [vmem:[%s1 + $0x20] sm:$0xf]
        %v250 = vld [vmem:[%s1 + $0x24] sm:$0xf]
        %v251 = vld [vmem:[%s1 + $0x28] sm:$0xf]
        %v252 = vld [vmem:[%s1 + $0x2c] sm:$0xf]
        %v253 = vld [vmem:[%s1 + $0x30] sm:$0xf]
        %v254 = vld [vmem:[%s1 + $0x34] sm:$0xf]
        %v255 = vld [vmem:[%s1 + $0x38] sm:$0xf]
        %v256 = vld [vmem:[%s1 + $0x3c] sm:$0xf]
        %v257 = vld [vmem:[%s2] sm:$0x1]
        %v259 = vlaneseq
        %v260 = vshrl.u32 %v259, 7
        %v261 = vsub.s32 0, %v260
        %v262 = vrot.slane %v257, %v261
        %v280 = vunpack.c.l.b16 %v241
        %v281 = vunpack.c.l.b16 %v242
        %v282 = vunpack.c.l.b16 %v243
        %v283 = vunpack.c.l.b16 %v244
        %v284 = vunpack.c.l.b16 %v245
        %v285 = vunpack.c.l.b16 %v246
        %v286 = vunpack.c.l.b16 %v247
        %v287 = vunpack.c.l.b16 %v248
        %v288 = vunpack.c.l.b16 %v249
        %v289 = vunpack.c.l.b16 %v250
        %v290 = vunpack.c.l.b16 %v251
        %v291 = vunpack.c.l.b16 %v252
        %v292 = vunpack.c.l.b16 %v253
        %v293 = vunpack.c.l.b16 %v254
        %v294 = vunpack.c.l.b16 %v255
        %v295 = vunpack.c.l.b16 %v256
        %v296 = vpack.c.b16 %v281, %v280
        %v297 = vpack.c.b16 %v283, %v282
        %v298 = vpack.c.b16 %v285, %v284
        %v299 = vpack.c.b16 %v287, %v286
        %v300 = vpack.c.b16 %v289, %v288
        %v301 = vpack.c.b16 %v291, %v290
        %v302 = vpack.c.b16 %v293, %v292
        %v303 = vpack.c.b16 %v295, %v294
        %312 = vmatprep.subr.bf16.mxu0 0
        %313 = vmatpush1.bf16.msra.mxu0 %v303
        %314 = vmatprep.subr.bf16.mxu0 0
        %315 = vmatpush1.bf16.msra.mxu0 %v302
        %316 = vmatprep.subr.bf16.mxu0 0
        %317 = vmatpush1.bf16.msra.mxu0 %v301
        %318 = vmatprep.subr.bf16.mxu0 0
        %319 = vmatpush1.bf16.msra.mxu0 %v300
        %320 = vmatprep.subr.bf16.mxu0 0
        %321 = vmatpush1.bf16.msra.mxu0 %v299
        %322 = vmatprep.subr.bf16.mxu0 0
        %323 = vmatpush1.bf16.msra.mxu0 %v298
        %324 = vmatprep.subr.bf16.mxu0 0
        %325 = vmatpush1.bf16.msra.mxu0 %v297
        %326 = vmatprep.subr.bf16.mxu0 0
        %327 = vmatpush1.bf16.msra.mxu0 %v296
        %328 = vmatprep.subr.bf16.mxu0 0
        %329 = vmatpush2.bf16.msra.mxu0 0
        %330 = vmatprep.subr.bf16.mxu0 0
        %331 = vmatpush2.bf16.msra.mxu0 0
        %332 = vmatprep.subr.bf16.mxu0 0
        %333 = vmatpush2.bf16.msra.mxu0 0
        %334 = vmatprep.subr.bf16.mxu0 0
        %335 = vmatpush2.bf16.msra.mxu0 0
        %336 = vmatprep.subr.bf16.mxu0 0
        %337 = vmatpush2.bf16.msra.mxu0 0
        %338 = vmatprep.subr.bf16.mxu0 0
        %339 = vmatpush2.bf16.msra.mxu0 0
        %340 = vmatprep.subr.bf16.mxu0 0
        %341 = vmatpush2.bf16.msra.mxu0 0
        %342 = vmatprep.subr.bf16.mxu0 0
        %343 = vmatpush2.bf16.msra.mxu0 0
        %344 = vmatprep.mubr.bf16.mxu0 0
        %345 = vmatmul.mubr.bf16.gmra.mxu0 %v239
        %v346 = vpop.f32.mrf.mxu0
        %v347 = vadd.f32 %v262, %v346
        %v348 = vpop.f32.mrf.mxu0
        %v349 = vpop.f32.mrf.mxu0
        %v350 = vadd.f32 %v262, %v349
        %v351 = vpop.f32.mrf.mxu0
        %352 = vdwg.mxu0
        %353 = vst.msk [vmem:[%s166] sm:$0xff] %vm180, %v347
        %354 = vst.msk [vmem:[%s166 + $0x8] sm:$0xff] %vm180, %v350
        %s355 = sand.u32 %s93, 1
        %s356 = scalar_lea.sflag [#allocation3], %s355
        %s357 = sand.u32 %s93, 1
        %s358 = smul.addr %s357, 16
        %s359 = scalar_lea.vmem [#allocation2], %s358
        // Predicated region
        $region33: #{patch_merging_forward.1} parent=31 // pred_check
          %p360 = pneg %p103
        $region34: #{patch_merging_forward.1} parent=31 // pred_check_branch
          %362 = sbr.rel (%p360) target = $region36
        $region35: #{patch_merging_forward.1} parent=31 // pred_region
          %s363 = smul.u32 2, %s17
          %s365 = ssub.s32 256, 256
          %366 = vsyncadd %s356, %s365
          %s367 = smul.addr %s363, 128
          %s368 = scalar_lea.hbm %s3, %s367
          %s369 = sshll.u32 %s359, 4
          %s370 = int_to_ptr.vmem [resolvable:$true] %s369
          %375 = dma.vmem_to_hbm [thread:$0]  %s370, 256, %s368, %s356, 128, 128, 8
        $region36: #{patch_merging_forward.1} parent=31 // pred_fallthru
          _
      $region32: #{patch_merging_forward.1} parent=5 // pred_fallthru
        _
      %p376 = scmp.le.s32.totalorder 2, %s12
      // Predicated region
      $region37: #{patch_merging_forward.1} parent=5 // pred_check
        %p377 = pneg %p376
      $region38: #{patch_merging_forward.1} parent=5 // pred_check_branch
        %379 = sbr.rel (%p377) target = $region40
      $region39: #{patch_merging_forward.1} parent=5 // pred_region
        %s380 = ssub.s32 %s12, 2
        // Predicated region
        $region41: #{patch_merging_forward.1} parent=39 // pred_check
          %p381 = pneg %p109
        $region42: #{patch_merging_forward.1} parent=39 // pred_check_branch
          %383 = sbr.rel (%p381) target = $region44
        $region43: #{patch_merging_forward.1} parent=39 // pred_region
          %s384 = sand.u32 %s94, 1
          %s385 = scalar_lea.sflag [#allocation3], %s384
          %s386 = sand.u32 %s94, 1
          %s387 = smul.addr %s386, 16
          %s388 = scalar_lea.vmem [#allocation2], %s387
          %389 = dma.done %s385, 256
        $region44: #{patch_merging_forward.1} parent=39 // pred_fallthru
          _
      $region40: #{patch_merging_forward.1} parent=5 // pred_fallthru
        _
    $region6: #{patch_merging_forward.1} parent=1 // loop_footer
      %s16 = sadd.s32 1, %s12
    $region7: #{patch_merging_forward.1} parent=1 // loop_footer_branch
      %11 = sbr.rel target = $region3
    $region8: #{patch_merging_forward.1} parent=1 // loop_exit
      _
    %390 = vsyncpa [#allocation3], 1
    %s391 = scalar_lea.sflag [#allocation3], 1
    %392 = vsyncpa %s391, 1

</llo_original>
